<compile_context>
chip_gen: v6e
topology: v6e:2x2x1
jax: 0.10.0
libtpu: 0.0.40
codegen_flags: <defaults>
</compile_context>

<pallas_src>
import jax
import jax.numpy as jnp
from jax.experimental import pallas as pl
from jax.experimental.pallas import tpu as pltpu


def _hbm_copy_kernel(x_hbm, o_hbm, sem):
    # Single whole-buffer HBM->HBM DMA; never routes bytes through VMEM/vregs.
    cp = pltpu.make_async_copy(x_hbm, o_hbm, sem)
    cp.start()
    cp.wait()


def squeeze_channels_view(x):
    """Recommended zero-cost path: the view is a pure metadata reshape."""
    return jnp.reshape(x, (x.shape[0], x.shape[1]))


def squeeze_channels(x):
    """SqueezeChannels.forward via Pallas: (B, C, 1, 1, ...) -> (B, C)."""
    B, C = x.shape[0], x.shape[1]
    assert x.size == B * C, (
        "SqueezeChannels expects trailing singleton dims (numel == B*C)")
    # Free metadata reshape (the actual 'view'); the kernel only materializes
    # the output buffer, which is the unavoidable floor for a real kernel.
    x2d = jnp.reshape(x, (B, C))
    return pl.pallas_call(
        _hbm_copy_kernel,
        out_shape=jax.ShapeDtypeStruct((B, C), x.dtype),
        in_specs=[pl.BlockSpec(memory_space=pl.ANY)],
        out_specs=pl.BlockSpec(memory_space=pl.ANY),
        scratch_shapes=[pltpu.SemaphoreType.DMA],
    )(x2d)


if __name__ == "__main__":
    key = jax.random.PRNGKey(0)

    # Shape implied by the module's forward: (B, C, 1, 1) NCHW after pooling.
    B, C = 2, 4
    x = jax.random.normal(key, (B, C, 1, 1), dtype=jnp.float32)

    out = jax.block_until_ready(squeeze_channels(x))
    ref = squeeze_channels_view(x)
    assert out.shape == (B, C), f"bad shape {out.shape}"
    assert out.dtype == x.dtype, f"bad dtype {out.dtype}"
    assert bool(jnp.all(out == ref)), "mismatch vs reference view/reshape"

    # Second case: larger, lane-dense, different dtype — same single-DMA path,
    # no tiling or VMEM sizing required.
    B2, C2 = 16, 384
    x2 = jax.random.normal(jax.random.PRNGKey(0), (B2, C2, 1, 1),
                           dtype=jnp.bfloat16)
    out2 = jax.block_until_ready(squeeze_channels(x2))
    assert out2.shape == (B2, C2)
    assert out2.dtype == x2.dtype
    assert bool(jnp.all(out2 == squeeze_channels_view(x2))), "large-case mismatch"

    print("KERNEL_OK")
</pallas_src>

<mosaic_0001>
module attributes {stable_mosaic.version = 11 : i64} {
  func.func @_hbm_copy_kernel(%arg0: memref<2x4xf32, #tpu.memory_space<any>>, %arg1: memref<2x4xf32, #tpu.memory_space<any>>, %arg2: memref<!tpu.dma_semaphore, #tpu.memory_space<semaphore_mem>>) attributes {dimension_semantics = [], scalar_prefetch = 0 : i64, scratch_operands = 1 : i64, tpu.core_type = #tpu.core_type<tc>} {
    tpu.enqueue_dma source(%arg0 : memref<2x4xf32, #tpu.memory_space<any>>) target(%arg1 : memref<2x4xf32, #tpu.memory_space<any>>) target_semaphore(%arg2 : memref<!tpu.dma_semaphore, #tpu.memory_space<semaphore_mem>>)
    tpu.wait_dma2 semaphore(%arg2 : memref<!tpu.dma_semaphore, #tpu.memory_space<semaphore_mem>>) src(%arg0 : memref<2x4xf32, #tpu.memory_space<any>>) dst(%arg1 : memref<2x4xf32, #tpu.memory_space<any>>)
    return
  }
}

</mosaic_0001>

<llo_original>
// kernel: tpu_custom_call.1
$region0: #{tpu_custom_call.1}
  #allocation0 [shape = 'u32[]', space=smem, size = 0x4, offset = 0x4, fixed_abs, tag = 'smem constant byte address 0x4 - core index']
  #allocation1 [shape = 'u32[144,128]{1,0:T(1,128)}', space=vmem, size = 0x12000, scoped, tag = 'internal scratch']
  #allocation2 [shape = 's32[1]{0}', space=sflag, size = 0x4, scoped, tag = 'scratch operand']
  #allocation3 [shape = 's32[]', space=sflag, size = 0x4, offset = 0, fixed_abs, tag = 'sflag constant byte address 0x0 - dummy sync flag']
  #allocation4 [shape = 'u32[0]{0}', space=smem, size = 0, offset = 0, fixed_abs, tag = 'smem constant byte address 0x0 - null']
  %s0 = inlined_call_operand.hbm [shape: f32[2,4], index: 0, kind: input, shape index: {}]
  %s1 = inlined_call_operand.hbm [shape: f32[2,4], index: 1, kind: output, shape index: {}]
  %s2 = sld [smem:[#allocation0]]
  $region2: #{tpu_custom_call.1} parent=0
    _
  %s4 = ssub.s32 1, %s2
  %s5 = scalar_select 0, %s4, %s2
  %s7 = sshll.u32 1, 14
  %s8 = sxor.u32 4294967295, %s7
  %12 = dma.general %s0, 32, %s1, [#allocation2], 131072, [#allocation4], 0, 0
  %s13 = smul.u32 2, 1
  %s14 = sshll.u32 %s13, 4
  %15 = dma.done [#allocation2], %s14
  %16 = vsyncmov [#allocation2]
  %s17 = vpop.sfrf %16
  %p18 = scmp.eq.s32.totalorder %s17, 0
  %p19 = pneg %p18
  %21 = shalt.err (%p19)

</llo_original>
